<compile_context>
chip_gen: v7x
topology: tpu7x:2x2x1
jax: 0.10.0
libtpu: 0.0.40
codegen_flags: <defaults>
</compile_context>

<pallas_src>
import functools

import numpy as np
import jax
import jax.numpy as jnp
from jax import lax
from jax.experimental import pallas as pl
from jax.experimental.pallas import tpu as pltpu

_NEG_BIG = -3e38


def _ntxent_tile_kernel(row_ref, col_ref, pos_ref, zk_ref, out_ref,
                        m_scr, l_scr, *, blk, n, n_pad, inv_t):
    r = pl.program_id(0)
    c = pl.program_id(1)
    last_c = pl.num_programs(1) - 1
    padded = n_pad != n                      # static Python bool

    # ---- init: fold the "extra" negative <row_i, zks_i> into the LSE ----
    @pl.when(c == 0)
    def _():
        extra = jnp.sum(row_ref[...].astype(jnp.float32) *
                        zk_ref[...].astype(jnp.float32),
                        axis=-1, keepdims=True) * inv_t              # (blk, 1)
        m_scr[...] = extra
        l_scr[...] = jnp.ones_like(l_scr)

    # ---- similarity tile: NT matmul on the MXU, scaled once by 1/T ----
    s = lax.dot_general(row_ref[...], col_ref[...],
                        dimension_numbers=(((1,), (1,)), ((), ())),
                        preferred_element_type=jnp.float32) * inv_t  # (blk, blk)

    if padded:  # mask zero-padded columns (only when N isn't tile aligned)
        col_g = c * blk + lax.broadcasted_iota(jnp.int32, (blk, blk), 1)
        col_ok = (col_g < n) | ((col_g >= n_pad) & (col_g < n_pad + n))
        s = jnp.where(col_ok, s, _NEG_BIG)

    def _online_lse(tile):
        m_prev = m_scr[...]
        m_new = jnp.maximum(m_prev, jnp.max(tile, axis=-1, keepdims=True))
        p_sum = jnp.sum(jnp.exp(tile - m_new), axis=-1, keepdims=True)
        l_scr[...] = jnp.exp(m_prev - m_new) * l_scr[...] + p_sum
        m_scr[...] = m_new

    # self-similarity mask only needed on diagonal tiles
    @pl.when(r == c)
    def _():
        ri = lax.broadcasted_iota(jnp.int32, (blk, blk), 0)
        ci = lax.broadcasted_iota(jnp.int32, (blk, blk), 1)
        _online_lse(jnp.where(ri == ci, _NEG_BIG, s))

    @pl.when(r != c)
    def _():
        _online_lse(s)

    # ---- finalize: loss_i = logsumexp_i - positive_i ----
    @pl.when(c == last_c)
    def _():
        pos = jnp.sum(row_ref[...].astype(jnp.float32) *
                      pos_ref[...].astype(jnp.float32),
                      axis=-1, keepdims=True) * inv_t                # (blk, 1)
        loss_rows = m_scr[...] + jnp.log(l_scr[...]) - pos
        out_tile = jnp.broadcast_to(loss_rows, out_ref.shape)        # lane-dense
        if padded:  # zero the contribution of padded rows
            row_g = r * blk + lax.broadcasted_iota(jnp.int32, out_ref.shape, 0)
            row_ok = (row_g < n) | ((row_g >= n_pad) & (row_g < n_pad + n))
            out_tile = jnp.where(row_ok, out_tile, 0.0)
        out_ref[...] = out_tile


def _round_up(x, m):
    return ((x + m - 1) // m) * m


def ntxent_loss_v2(zis, zjs, zks, *, temperature, use_cosine_similarity,
                   block=256, matmul_dtype=jnp.bfloat16):
    """Matches NTXentLossv2.forward(zis, zjs, zks). Inputs: (B, D) each."""
    n, d = zis.shape
    zis = zis.astype(jnp.float32)
    zjs = zjs.astype(jnp.float32)
    zks = zks.astype(jnp.float32)

    if use_cosine_similarity:
        # cosine similarity == dot product of L2-normalized vectors
        # (normalization done in f32; only the matmul operands go to bf16).
        def _norm(x):
            nrm = jnp.sqrt(jnp.sum(x * x, axis=-1, keepdims=True))
            return x / jnp.maximum(nrm, 1e-8)
        zis, zjs, zks = _norm(zis), _norm(zjs), _norm(zks)

    # Tile / padding geometry.  blk is a multiple of 16 (bf16 sublane tile)
    # and divides n_pad, so the positive-pair block and the zks block are
    # addressed with pure block-level index_maps (no gather, no duplicated
    # zks operand).
    blk = max(16, min(int(block), _round_up(n, 16)))
    blk = _round_up(blk, 16)
    n_pad = _round_up(n, blk)
    d_pad = _round_up(d, 128)

    def _pad(x):
        return jnp.pad(x, ((0, n_pad - n), (0, d_pad - d)))

    rep = jnp.concatenate([_pad(zjs), _pad(zis)], axis=0).astype(matmul_dtype)
    zk = _pad(zks).astype(matmul_dtype)

    two_np = 2 * n_pad
    nrb = two_np // blk            # row blocks == col blocks (square tiles)
    shift = n_pad // blk           # block-level "roll" for the positive pairs
    nkb = n_pad // blk             # zks blocks

    kernel = functools.partial(_ntxent_tile_kernel, blk=blk, n=n, n_pad=n_pad,
                               inv_t=float(1.0 / temperature))

    rows = pl.pallas_call(
        kernel,
        out_shape=jax.ShapeDtypeStruct((two_np, 128), jnp.float32),
        grid_spec=pltpu.PrefetchScalarGridSpec(
            num_scalar_prefetch=0,
            grid=(nrb, nrb),
            in_specs=[
                pl.BlockSpec((blk, d_pad), lambda r, c: (r, 0)),          # row tile
                pl.BlockSpec((blk, d_pad), lambda r, c: (c, 0)),          # streamed col tile
                pl.BlockSpec((blk, d_pad),
                             lambda r, c: ((r + shift) % nrb, 0)),        # positive rows
                pl.BlockSpec((blk, d_pad), lambda r, c: (r % nkb, 0)),    # zks rows
            ],
            out_specs=pl.BlockSpec((blk, 128), lambda r, c: (r, 0)),
            scratch_shapes=[pltpu.VMEM((blk, 1), jnp.float32),   # running max
                            pltpu.VMEM((blk, 1), jnp.float32)],  # running sum-exp
        ),
        compiler_params=pltpu.CompilerParams(
            dimension_semantics=("parallel", "arbitrary"),
            vmem_limit_bytes=48 * 1024 * 1024),
    )(rep, rep, rep, zk)

    return jnp.sum(rows[:, 0]) / jnp.float32(2 * n)


def _ntxent_reference(zis, zjs, zks, *, temperature, use_cosine_similarity):
    """Pure-numpy (float64) transcription of NTXentLossv2.forward."""
    zis, zjs, zks = (np.asarray(x, dtype=np.float64) for x in (zis, zjs, zks))
    if use_cosine_similarity:
        def _norm(x):
            return x / np.maximum(np.linalg.norm(x, axis=-1, keepdims=True), 1e-8)
        zis, zjs, zks = _norm(zis), _norm(zjs), _norm(zks)
    n = zis.shape[0]
    rep = np.concatenate([zjs, zis], axis=0)
    sim = rep @ rep.T
    positives = np.concatenate([np.diag(sim, n), np.diag(sim, -n)]).reshape(2 * n, 1)
    mask = (1 - (np.eye(2 * n) + np.eye(2 * n, k=n) + np.eye(2 * n, k=-n))).astype(bool)
    negatives = sim[mask].reshape(2 * n, -1)
    rep2 = np.concatenate([zjs, zks], axis=0)
    rep3 = np.concatenate([zis, zks], axis=0)
    negatives_a = np.concatenate([np.diag(rep2 @ rep2.T, n),
                                  np.diag(rep3 @ rep3.T, n)]).reshape(2 * n, 1)
    logits = np.concatenate([positives, negatives, negatives_a], axis=1) / temperature
    m = logits.max(axis=1, keepdims=True)
    lse = m[:, 0] + np.log(np.exp(logits - m).sum(axis=1))
    return np.sum(lse - logits[:, 0]) / (2 * n)


if __name__ == "__main__":
    key = jax.random.PRNGKey(0)
    k1, k2, k3 = jax.random.split(key, 3)

    batch_size = 4
    dim = 32
    temperature = 0.5

    zis = jax.random.normal(k1, (batch_size, dim), dtype=jnp.float32)
    zjs = jax.random.normal(k2, (batch_size, dim), dtype=jnp.float32)
    zks = jax.random.normal(k3, (batch_size, dim), dtype=jnp.float32)

    loss = ntxent_loss_v2(zis, zjs, zks, temperature=temperature,
                          use_cosine_similarity=True)
    loss = jax.block_until_ready(loss)

    ref = _ntxent_reference(np.asarray(zis), np.asarray(zjs), np.asarray(zks),
                            temperature=temperature, use_cosine_similarity=True)
    if (not np.isfinite(float(loss))) or abs(float(loss) - float(ref)) > 0.1:
        raise AssertionError(f"kernel loss {float(loss)} != reference {float(ref)}")
    print("KERNEL_OK")
</pallas_src>

<mosaic_0001>
module attributes {stable_mosaic.version = 11 : i64} {
  func.func @_ntxent_tile_kernel(%arg0: i32, %arg1: i32, %arg2: memref<16x128xbf16, #tpu.memory_space<vmem>>, %arg3: memref<16x128xbf16, #tpu.memory_space<vmem>>, %arg4: memref<16x128xbf16, #tpu.memory_space<vmem>>, %arg5: memref<16x128xbf16, #tpu.memory_space<vmem>>, %arg6: memref<16x128xf32, #tpu.memory_space<vmem>>, %arg7: memref<16x1xf32, #tpu.memory_space<vmem>>, %arg8: memref<16x1xf32, #tpu.memory_space<vmem>>) attributes {dimension_semantics = [#tpu.dimension_semantics<parallel>, #tpu.dimension_semantics<arbitrary>], iteration_bounds = array<i64: 2, 2>, scalar_prefetch = 0 : i64, scratch_operands = 2 : i64, tpu.core_type = #tpu.core_type<tc>, window_params = [{transform_indices = @transform_0, window_bounds = array<i64: 16, 128>}, {transform_indices = @transform_1, window_bounds = array<i64: 16, 128>}, {transform_indices = @transform_2, window_bounds = array<i64: 16, 128>}, {transform_indices = @transform_3, window_bounds = array<i64: 16, 128>}, {transform_indices = @transform_4, window_bounds = array<i64: 16, 128>}]} {
    %c0_i32 = arith.constant 0 : i32
    %0 = arith.cmpi eq, %arg1, %c0_i32 : i32
    %1 = arith.extui %0 : i1 to i32
    %c0_i32_0 = arith.constant 0 : i32
    %2 = arith.cmpi ne, %1, %c0_i32_0 : i32
    scf.if %2 {
      %c0_10 = arith.constant 0 : index
      %c0_11 = arith.constant 0 : index
      %31 = vector.load %arg2[%c0_10, %c0_11] : memref<16x128xbf16, #tpu.memory_space<vmem>>, vector<16x128xbf16>
      %32 = arith.extf %31 : vector<16x128xbf16> to vector<16x128xf32>
      %c0_12 = arith.constant 0 : index
      %c0_13 = arith.constant 0 : index
      %33 = vector.load %arg5[%c0_12, %c0_13] : memref<16x128xbf16, #tpu.memory_space<vmem>>, vector<16x128xbf16>
      %34 = arith.extf %33 : vector<16x128xbf16> to vector<16x128xf32>
      %35 = arith.mulf %32, %34 : vector<16x128xf32>
      %cst_14 = arith.constant dense<0.000000e+00> : vector<16xf32>
      %36 = vector.multi_reduction <add>, %35, %cst_14 [1] : vector<16x128xf32> to vector<16xf32>
      %37 = vector.shape_cast %36 : vector<16xf32> to vector<16x1xf32>
      %cst_15 = arith.constant 2.000000e+00 : f32
      %38 = vector.broadcast %cst_15 : f32 to vector<16x1xf32>
      %39 = arith.mulf %37, %38 : vector<16x1xf32>
      %c0_16 = arith.constant 0 : index
      %c0_17 = arith.constant 0 : index
      %40 = vector.load %arg7[%c0_16, %c0_17] : memref<16x1xf32, #tpu.memory_space<vmem>>, vector<16x1xf32>
      tpu.vector_store %arg7[%c0_16, %c0_17], %39 {strides = array<i32>} : memref<16x1xf32, #tpu.memory_space<vmem>>, vector<16x1xf32>,
      %cst_18 = arith.constant 1.000000e+00 : f32
      %41 = vector.broadcast %cst_18 : f32 to vector<16x1xf32>
      %c0_19 = arith.constant 0 : index
      %c0_20 = arith.constant 0 : index
      %42 = vector.load %arg8[%c0_19, %c0_20] : memref<16x1xf32, #tpu.memory_space<vmem>>, vector<16x1xf32>
      tpu.vector_store %arg8[%c0_19, %c0_20], %41 {strides = array<i32>} : memref<16x1xf32, #tpu.memory_space<vmem>>, vector<16x1xf32>,
    } else {
    }
    %c0 = arith.constant 0 : index
    %c0_1 = arith.constant 0 : index
    %3 = vector.load %arg2[%c0, %c0_1] : memref<16x128xbf16, #tpu.memory_space<vmem>>, vector<16x128xbf16>
    %c0_2 = arith.constant 0 : index
    %c0_3 = arith.constant 0 : index
    %4 = vector.load %arg3[%c0_2, %c0_3] : memref<16x128xbf16, #tpu.memory_space<vmem>>, vector<16x128xbf16>
    %cst = arith.constant dense<0.000000e+00> : vector<16x16xf32>
    %5 = tpu.matmul %3, %4, %cst {dimension_numbers = #tpu.dot_dimension_numbers<[1], [1], [0], [0], [0, 0, 1, 0], [], []>} : vector<16x128xbf16>, vector<16x128xbf16>, vector<16x16xf32> -> vector<16x16xf32>
    %cst_4 = arith.constant 2.000000e+00 : f32
    %6 = vector.broadcast %cst_4 : f32 to vector<16x16xf32>
    %7 = arith.mulf %5, %6 : vector<16x16xf32>
    %c16_i32 = arith.constant 16 : i32
    %8 = arith.muli %arg1, %c16_i32 : i32
    %9 = tpu.iota {dimensions = array<i32: 1>} : vector<16x16xi32>
    %10 = vector.broadcast %8 : i32 to vector<16x16xi32>
    %11 = arith.addi %10, %9 : vector<16x16xi32>
    %c4_i32 = arith.constant 4 : i32
    %12 = vector.broadcast %c4_i32 : i32 to vector<16x16xi32>
    %13 = arith.cmpi slt, %11, %12 : vector<16x16xi32>
    %c16_i32_5 = arith.constant 16 : i32
    %14 = vector.broadcast %c16_i32_5 : i32 to vector<16x16xi32>
    %15 = arith.cmpi sge, %11, %14 : vector<16x16xi32>
    %c20_i32 = arith.constant 20 : i32
    %16 = vector.broadcast %c20_i32 : i32 to vector<16x16xi32>
    %17 = arith.cmpi slt, %11, %16 : vector<16x16xi32>
    %18 = arith.andi %15, %17 : vector<16x16xi1>
    %19 = arith.ori %13, %18 : vector<16x16xi1>
    %cst_6 = arith.constant -3.000000e+38 : f32
    %20 = vector.broadcast %cst_6 : f32 to vector<16x16xf32>
    %21 = arith.select %19, %7, %20 : vector<16x16xi1>, vector<16x16xf32>
    %22 = arith.cmpi eq, %arg0, %arg1 : i32
    %23 = arith.extui %22 : i1 to i32
    %c0_i32_7 = arith.constant 0 : i32
    %24 = arith.cmpi ne, %23, %c0_i32_7 : i32
    scf.if %24 {
      %31 = tpu.iota {dimensions = array<i32: 0>} : vector<16x16xi32>
      %32 = tpu.iota {dimensions = array<i32: 1>} : vector<16x16xi32>
      %33 = arith.cmpi eq, %31, %32 : vector<16x16xi32>
      %cst_10 = arith.constant -3.000000e+38 : f32
      %34 = vector.broadcast %cst_10 : f32 to vector<16x16xf32>
      %35 = arith.select %33, %34, %21 : vector<16x16xi1>, vector<16x16xf32>
      %c0_11 = arith.constant 0 : index
      %c0_12 = arith.constant 0 : index
      %36 = vector.load %arg7[%c0_11, %c0_12] : memref<16x1xf32, #tpu.memory_space<vmem>>, vector<16x1xf32>
      %cst_13 = arith.constant dense<0xFF800000> : vector<16xf32>
      %37 = vector.multi_reduction <maximumf>, %35, %cst_13 [1] : vector<16x16xf32> to vector<16xf32>
      %38 = vector.shape_cast %37 : vector<16xf32> to vector<16x1xf32>
      %39 = arith.maximumf %36, %38 : vector<16x1xf32>
      %40 = vector.broadcast %39 : vector<16x1xf32> to vector<16x16xf32>
      %41 = arith.subf %35, %40 : vector<16x16xf32>
      %42 = math.exp %41 : vector<16x16xf32>
      %cst_14 = arith.constant dense<0.000000e+00> : vector<16xf32>
      %43 = vector.multi_reduction <add>, %42, %cst_14 [1] : vector<16x16xf32> to vector<16xf32>
      %44 = vector.shape_cast %43 : vector<16xf32> to vector<16x1xf32>
      %45 = arith.subf %36, %39 : vector<16x1xf32>
      %46 = math.exp %45 : vector<16x1xf32>
      %c0_15 = arith.constant 0 : index
      %c0_16 = arith.constant 0 : index
      %47 = vector.load %arg8[%c0_15, %c0_16] : memref<16x1xf32, #tpu.memory_space<vmem>>, vector<16x1xf32>
      %48 = arith.mulf %46, %47 : vector<16x1xf32>
      %49 = arith.addf %48, %44 : vector<16x1xf32>
      %c0_17 = arith.constant 0 : index
      %c0_18 = arith.constant 0 : index
      %50 = vector.load %arg8[%c0_17, %c0_18] : memref<16x1xf32, #tpu.memory_space<vmem>>, vector<16x1xf32>
      tpu.vector_store %arg8[%c0_17, %c0_18], %49 {strides = array<i32>} : memref<16x1xf32, #tpu.memory_space<vmem>>, vector<16x1xf32>,
      %c0_19 = arith.constant 0 : index
      %c0_20 = arith.constant 0 : index
      %51 = vector.load %arg7[%c0_19, %c0_20] : memref<16x1xf32, #tpu.memory_space<vmem>>, vector<16x1xf32>
      tpu.vector_store %arg7[%c0_19, %c0_20], %39 {strides = array<i32>} : memref<16x1xf32, #tpu.memory_space<vmem>>, vector<16x1xf32>,
    } else {
    }
    %25 = arith.cmpi ne, %arg0, %arg1 : i32
    %26 = arith.extui %25 : i1 to i32
    %c0_i32_8 = arith.constant 0 : i32
    %27 = arith.cmpi ne, %26, %c0_i32_8 : i32
    scf.if %27 {
      %c0_10 = arith.constant 0 : index
      %c0_11 = arith.constant 0 : index
      %31 = vector.load %arg7[%c0_10, %c0_11] : memref<16x1xf32, #tpu.memory_space<vmem>>, vector<16x1xf32>
      %cst_12 = arith.constant dense<0xFF800000> : vector<16xf32>
      %32 = vector.multi_reduction <maximumf>, %21, %cst_12 [1] : vector<16x16xf32> to vector<16xf32>
      %33 = vector.shape_cast %32 : vector<16xf32> to vector<16x1xf32>
      %34 = arith.maximumf %31, %33 : vector<16x1xf32>
      %35 = vector.broadcast %34 : vector<16x1xf32> to vector<16x16xf32>
      %36 = arith.subf %21, %35 : vector<16x16xf32>
      %37 = math.exp %36 : vector<16x16xf32>
      %cst_13 = arith.constant dense<0.000000e+00> : vector<16xf32>
      %38 = vector.multi_reduction <add>, %37, %cst_13 [1] : vector<16x16xf32> to vector<16xf32>
      %39 = vector.shape_cast %38 : vector<16xf32> to vector<16x1xf32>
      %40 = arith.subf %31, %34 : vector<16x1xf32>
      %41 = math.exp %40 : vector<16x1xf32>
      %c0_14 = arith.constant 0 : index
      %c0_15 = arith.constant 0 : index
      %42 = vector.load %arg8[%c0_14, %c0_15] : memref<16x1xf32, #tpu.memory_space<vmem>>, vector<16x1xf32>
      %43 = arith.mulf %41, %42 : vector<16x1xf32>
      %44 = arith.addf %43, %39 : vector<16x1xf32>
      %c0_16 = arith.constant 0 : index
      %c0_17 = arith.constant 0 : index
      %45 = vector.load %arg8[%c0_16, %c0_17] : memref<16x1xf32, #tpu.memory_space<vmem>>, vector<16x1xf32>
      tpu.vector_store %arg8[%c0_16, %c0_17], %44 {strides = array<i32>} : memref<16x1xf32, #tpu.memory_space<vmem>>, vector<16x1xf32>,
      %c0_18 = arith.constant 0 : index
      %c0_19 = arith.constant 0 : index
      %46 = vector.load %arg7[%c0_18, %c0_19] : memref<16x1xf32, #tpu.memory_space<vmem>>, vector<16x1xf32>
      tpu.vector_store %arg7[%c0_18, %c0_19], %34 {strides = array<i32>} : memref<16x1xf32, #tpu.memory_space<vmem>>, vector<16x1xf32>,
    } else {
    }
    %c1_i32 = arith.constant 1 : i32
    %28 = arith.cmpi eq, %arg1, %c1_i32 : i32
    %29 = arith.extui %28 : i1 to i32
    %c0_i32_9 = arith.constant 0 : i32
    %30 = arith.cmpi ne, %29, %c0_i32_9 : i32
    scf.if %30 {
      %c0_10 = arith.constant 0 : index
      %c0_11 = arith.constant 0 : index
      %31 = vector.load %arg2[%c0_10, %c0_11] : memref<16x128xbf16, #tpu.memory_space<vmem>>, vector<16x128xbf16>
      %32 = arith.extf %31 : vector<16x128xbf16> to vector<16x128xf32>
      %c0_12 = arith.constant 0 : index
      %c0_13 = arith.constant 0 : index
      %33 = vector.load %arg4[%c0_12, %c0_13] : memref<16x128xbf16, #tpu.memory_space<vmem>>, vector<16x128xbf16>
      %34 = arith.extf %33 : vector<16x128xbf16> to vector<16x128xf32>
      %35 = arith.mulf %32, %34 : vector<16x128xf32>
      %cst_14 = arith.constant dense<0.000000e+00> : vector<16xf32>
      %36 = vector.multi_reduction <add>, %35, %cst_14 [1] : vector<16x128xf32> to vector<16xf32>
      %37 = vector.shape_cast %36 : vector<16xf32> to vector<16x1xf32>
      %cst_15 = arith.constant 2.000000e+00 : f32
      %38 = vector.broadcast %cst_15 : f32 to vector<16x1xf32>
      %39 = arith.mulf %37, %38 : vector<16x1xf32>
      %c0_16 = arith.constant 0 : index
      %c0_17 = arith.constant 0 : index
      %40 = vector.load %arg7[%c0_16, %c0_17] : memref<16x1xf32, #tpu.memory_space<vmem>>, vector<16x1xf32>
      %c0_18 = arith.constant 0 : index
      %c0_19 = arith.constant 0 : index
      %41 = vector.load %arg8[%c0_18, %c0_19] : memref<16x1xf32, #tpu.memory_space<vmem>>, vector<16x1xf32>
      %42 = math.log %41 : vector<16x1xf32>
      %43 = arith.addf %40, %42 : vector<16x1xf32>
      %44 = arith.subf %43, %39 : vector<16x1xf32>
      %45 = vector.shape_cast %44 : vector<16x1xf32> to vector<16x1xf32>
      %46 = vector.broadcast %45 : vector<16x1xf32> to vector<16x128xf32>
      %c16_i32_20 = arith.constant 16 : i32
      %47 = arith.muli %arg0, %c16_i32_20 : i32
      %48 = tpu.iota {dimensions = array<i32: 0>} : vector<16x128xi32>
      %49 = vector.broadcast %47 : i32 to vector<16x128xi32>
      %50 = arith.addi %49, %48 : vector<16x128xi32>
      %c4_i32_21 = arith.constant 4 : i32
      %51 = vector.broadcast %c4_i32_21 : i32 to vector<16x128xi32>
      %52 = arith.cmpi slt, %50, %51 : vector<16x128xi32>
      %c16_i32_22 = arith.constant 16 : i32
      %53 = vector.broadcast %c16_i32_22 : i32 to vector<16x128xi32>
      %54 = arith.cmpi sge, %50, %53 : vector<16x128xi32>
      %c20_i32_23 = arith.constant 20 : i32
      %55 = vector.broadcast %c20_i32_23 : i32 to vector<16x128xi32>
      %56 = arith.cmpi slt, %50, %55 : vector<16x128xi32>
      %57 = arith.andi %54, %56 : vector<16x128xi1>
      %58 = arith.ori %52, %57 : vector<16x128xi1>
      %cst_24 = arith.constant 0.000000e+00 : f32
      %59 = vector.broadcast %cst_24 : f32 to vector<16x128xf32>
      %60 = arith.select %58, %46, %59 : vector<16x128xi1>, vector<16x128xf32>
      %c0_25 = arith.constant 0 : index
      %c0_26 = arith.constant 0 : index
      %61 = vector.load %arg6[%c0_25, %c0_26] : memref<16x128xf32, #tpu.memory_space<vmem>>, vector<16x128xf32>
      tpu.vector_store %arg6[%c0_25, %c0_26], %60 {strides = array<i32>} : memref<16x128xf32, #tpu.memory_space<vmem>>, vector<16x128xf32>,
    } else {
    }
    return
  }
  func.func @transform_0(%arg0: i32, %arg1: i32) -> (i32, i32) {
    %c0_i32 = arith.constant 0 : i32
    %c0_i32_0 = arith.constant 0 : i32
    return %arg0, %c0_i32 : i32, i32
  }
  func.func @transform_1(%arg0: i32, %arg1: i32) -> (i32, i32) {
    %c0_i32 = arith.constant 0 : i32
    %c0_i32_0 = arith.constant 0 : i32
    return %arg1, %c0_i32 : i32, i32
  }
  func.func @transform_2(%arg0: i32, %arg1: i32) -> (i32, i32) {
    %c1_i32 = arith.constant 1 : i32
    %0 = arith.addi %arg0, %c1_i32 : i32
    %c2_i32 = arith.constant 2 : i32
    %c0_i32 = arith.constant 0 : i32
    %1 = arith.cmpi eq, %c2_i32, %c0_i32 : i32
    %c1_i32_0 = arith.constant 1 : i32
    %2 = arith.select %1, %c1_i32_0, %c2_i32 : i32
    %3 = arith.remsi %0, %2 : i32
    %c0_i32_1 = arith.constant 0 : i32
    %4 = arith.cmpi ne, %3, %c0_i32_1 : i32
    %c0_i32_2 = arith.constant 0 : i32
    %5 = arith.cmpi slt, %3, %c0_i32_2 : i32
    %c0_i32_3 = arith.constant 0 : i32
    %6 = arith.cmpi slt, %2, %c0_i32_3 : i32
    %7 = arith.xori %5, %6 : i1
    %8 = arith.andi %7, %4 : i1
    %9 = arith.addi %3, %2 : i32
    %10 = arith.select %8, %9, %3 : i32
    %c0_i32_4 = arith.constant 0 : i32
    %c0_i32_5 = arith.constant 0 : i32
    return %10, %c0_i32_4 : i32, i32
  }
  func.func @transform_3(%arg0: i32, %arg1: i32) -> (i32, i32) {
    %c1_i32 = arith.constant 1 : i32
    %c0_i32 = arith.constant 0 : i32
    %0 = arith.cmpi eq, %c1_i32, %c0_i32 : i32
    %c1_i32_0 = arith.constant 1 : i32
    %1 = arith.select %0, %c1_i32_0, %c1_i32 : i32
    %2 = arith.remsi %arg0, %1 : i32
    %c0_i32_1 = arith.constant 0 : i32
    %3 = arith.cmpi ne, %2, %c0_i32_1 : i32
    %c0_i32_2 = arith.constant 0 : i32
    %4 = arith.cmpi slt, %2, %c0_i32_2 : i32
    %c0_i32_3 = arith.constant 0 : i32
    %5 = arith.cmpi slt, %1, %c0_i32_3 : i32
    %6 = arith.xori %4, %5 : i1
    %7 = arith.andi %6, %3 : i1
    %8 = arith.addi %2, %1 : i32
    %9 = arith.select %7, %8, %2 : i32
    %c0_i32_4 = arith.constant 0 : i32
    %c0_i32_5 = arith.constant 0 : i32
    return %9, %c0_i32_4 : i32, i32
  }
  func.func @transform_4(%arg0: i32, %arg1: i32) -> (i32, i32) {
    %c0_i32 = arith.constant 0 : i32
    %c0_i32_0 = arith.constant 0 : i32
    return %arg0, %c0_i32 : i32, i32
  }
}

</mosaic_0001>

<llo_original>
// kernel: tpu_custom_call.1
$region0: #{tpu_custom_call.1}
  #allocation0 [shape = 'u32[]', space=smem, size = 0x4, offset = 0x4, fixed_abs, tag = 'smem constant byte address 0x4 - core index']
  #allocation1 [shape = 'u32[144,128]{1,0:T(1,128)}', space=vmem, size = 0x12000, scoped, tag = 'internal scratch']
  #allocation2 [shape = 'f32[16,1]{1,0:T(8,128)}', space=vmem, size = 0x2000, scoped, tag = 'scratch operand']
  #allocation3 [shape = 'f32[16,1]{1,0:T(8,128)}', space=vmem, size = 0x2000, scoped, tag = 'scratch operand']
  %s0 = inlined_call_operand.hbm [shape: bf16[32,128], index: 0, kind: input, shape index: {}]
  %s1 = inlined_call_operand.hbm [shape: bf16[32,128], index: 1, kind: input, shape index: {}]
  %s2 = inlined_call_operand.hbm [shape: bf16[32,128], index: 2, kind: input, shape index: {}]
  %s3 = inlined_call_operand.vmem [shape: bf16[16,128], index: 3, kind: input, shape index: {}]
  %s4 = inlined_call_operand.hbm [shape: f32[32,128], index: 4, kind: output, shape index: {}]
  %s5 = sld [smem:[#allocation0]]
  $region77: #{tpu_custom_call.1} parent=0
    _
  %s7 = ssub.s32 1, %s5
  %s8 = scalar_select 0, %s7, %s5
  $region1: #{tpu_custom_call.1} parent=0
    #allocation4 [shape = 'u8[8192]{0}', space=vmem, size = 0x2000, scoped, tag = 'input window, operand 0']
    #allocation5 [shape = 's32[2]{0}', space=sflag, size = 0x8, scoped, tag = 'scoped memory for tpu_custom_call.1']
    #allocation6 [shape = 's32[2]{0}', space=sflag, size = 0x8, scoped, tag = 'scoped memory for tpu_custom_call.1']
    #allocation7 [shape = 'u8[8192]{0}', space=vmem, size = 0x2000, scoped, tag = 'input window, operand 1']
    #allocation8 [shape = 's32[2]{0}', space=sflag, size = 0x8, scoped, tag = 'scoped memory for tpu_custom_call.1']
    #allocation9 [shape = 'u8[8192]{0}', space=vmem, size = 0x2000, scoped, tag = 'input window, operand 2']
    #allocation10 [shape = 'u8[16384]{0}', space=vmem, size = 0x4000, scoped, tag = 'output window, operand 0']
    %9 = vsyncpa [#allocation5], 0
    %s10 = scalar_lea.sflag [#allocation5], 1
    %11 = vsyncpa %s10, 0
    %12 = vsyncpa [#allocation8], 0
    %s13 = scalar_lea.sflag [#allocation8], 1
    %14 = vsyncpa %s13, 0
    %15 = vsyncpa [#allocation6], 0
    %s16 = scalar_lea.sflag [#allocation6], 1
    %17 = vsyncpa %s16, 0
    loop: start=0, step=1, limit=6
    $region2: #{tpu_custom_call.1} parent=1 // loop_pre_header
      _
    $region3: #{tpu_custom_call.1} parent=1 // loop_header
      %s19 = sphi 0, %s23
      %p20 = scmp.ge.s32.totalorder %s19, 6
      %s26 = sphi 0, %s38
      %s27 = sphi 0, %s34
      %s28 = sphi 0, %s26
      %s29 = sphi 0, %s27
      %s30 = sphi 0, %s28
      %s31 = sphi 0, %s29
      %s41 = sphi 0, %s43
      %s44 = sphi 0, %s41
      %s45 = sphi 0, %s44
      %s61 = sphi 0, %s45
      %s67 = sphi 0, %s69
      %s70 = sphi 0, %s67
      %s71 = sphi 0, %s70
      %s87 = sphi 0, %s71
      %s119 = sphi 0, %s121
      %s122 = sphi 0, %s119
      %s123 = sphi 0, %s122
      %s139 = sphi 0, %s123
      %s143 = sphi 0, %s143
      %s145 = sphi 0, %s143
      %s146 = sphi 0, %s145
      %s160 = sphi 0, %s146
      %s166 = sphi 0, %s168
      %s169 = sphi 0, %s166
      %s170 = sphi 0, %s169
      %s186 = sphi 0, %s170
    $region4: #{tpu_custom_call.1} parent=1 // loop_header_branch
      %22 = sbr.rel (%p20) target = $region8
    $region5: #{tpu_custom_call.1} parent=1 // loop_body
      %s24 = ssub.s32 %s19, 1
      %s25 = ssub.s32 %s19, 2
      %s32 = sadd.s32 1, %s27
      %p33 = scmp.ge.s32.totalorder %s32, 2
      %s34 = scalar_select %p33, 0, %s32
      %s35 = sadd.s32 1, %s26
      %s36 = scalar_select %p33, %s35, %s26
      %p37 = scmp.ge.s32.totalorder %s36, 2
      %s38 = scalar_select %p37, 0, %s36
      %s39 = ssub.s32 %s26, %s38
      %p40 = scmp.eq.s32.totalorder %s39, 0
      %s42 = sadd.s32 %s41, 1
      %s43 = scalar_select %p40, %s41, %s42
      %p46 = pneg %p40
      %p47 = scmp.eq.s32.totalorder %s19, 3
      %p48 = por %p46, %p47
      %p49 = scmp.ne.s32.totalorder %s41, %s44
      %p50 = scmp.eq.s32.totalorder %s19, 0
      %p51 = por %p49, %p50
      %p52 = scmp.ne.s32.totalorder %s41, %s44
      %p53 = scmp.eq.s32.totalorder %s24, 3
      %p54 = por %p52, %p53
      %p55 = scmp.ne.s32.totalorder %s44, %s45
      %p56 = scmp.eq.s32.totalorder %s24, 0
      %p57 = por %p55, %p56
      %p58 = scmp.ne.s32.totalorder %s44, %s45
      %p59 = scmp.eq.s32.totalorder %s25, 3
      %p60 = por %p58, %p59
      %p62 = scmp.ne.s32.totalorder %s45, %s61
      %p63 = scmp.eq.s32.totalorder %s25, 0
      %p64 = por %p62, %p63
      %s65 = ssub.s32 %s27, %s34
      %p66 = scmp.eq.s32.totalorder %s65, 0
      %s68 = sadd.s32 %s67, 1
      %s69 = scalar_select %p66, %s67, %s68
      %p72 = pneg %p66
      %p73 = scmp.eq.s32.totalorder %s19, 3
      %p74 = por %p72, %p73
      %p75 = scmp.ne.s32.totalorder %s67, %s70
      %p76 = scmp.eq.s32.totalorder %s19, 0
      %p77 = por %p75, %p76
      %p78 = scmp.ne.s32.totalorder %s67, %s70
      %p79 = scmp.eq.s32.totalorder %s24, 3
      %p80 = por %p78, %p79
      %p81 = scmp.ne.s32.totalorder %s70, %s71
      %p82 = scmp.eq.s32.totalorder %s24, 0
      %p83 = por %p81, %p82
      %p84 = scmp.ne.s32.totalorder %s70, %s71
      %p85 = scmp.eq.s32.totalorder %s25, 3
      %p86 = por %p84, %p85
      %p88 = scmp.ne.s32.totalorder %s71, %s87
      %p89 = scmp.eq.s32.totalorder %s25, 0
      %p90 = por %p88, %p89
      %s91 = sadd.s32 %s26, 1
      %p92 = scmp.lt.s32.totalorder %s91, 0
      %s93 = ssub.s32 0, %s91
      %s94 = scalar_select %p92, %s93, %s91
      %s95 = sand.u32 %s94, 1
      %s96 = ssub.s32 0, %s95
      %s97 = scalar_select %p92, %s96, %s95
      %p98 = scmp.ne.s32.totalorder %s97, 0
      %p99 = scmp.lt.s32.totalorder %s97, 0
      %p100 = pnand %p99, %p98
      %p101 = pneg %p100
      %s102 = sadd.s32 %s97, 2
      %s103 = scalar_select %p101, %s102, %s97
      %s104 = sadd.s32 %s38, 1
      %p105 = scmp.lt.s32.totalorder %s104, 0
      %s106 = ssub.s32 0, %s104
      %s107 = scalar_select %p105, %s106, %s104
      %s108 = sand.u32 %s107, 1
      %s109 = ssub.s32 0, %s108
      %s110 = scalar_select %p105, %s109, %s108
      %p111 = scmp.ne.s32.totalorder %s110, 0
      %p112 = scmp.lt.s32.totalorder %s110, 0
      %p113 = pnand %p112, %p111
      %p114 = pneg %p113
      %s115 = sadd.s32 %s110, 2
      %s116 = scalar_select %p114, %s115, %s110
      %s117 = ssub.s32 %s103, %s116
      %p118 = scmp.eq.s32.totalorder %s117, 0
      %s120 = sadd.s32 %s119, 1
      %s121 = scalar_select %p118, %s119, %s120
      %p124 = pneg %p118
      %p125 = scmp.eq.s32.totalorder %s19, 3
      %p126 = por %p124, %p125
      %p127 = scmp.ne.s32.totalorder %s119, %s122
      %p128 = scmp.eq.s32.totalorder %s19, 0
      %p129 = por %p127, %p128
      %p130 = scmp.ne.s32.totalorder %s119, %s122
      %p131 = scmp.eq.s32.totalorder %s24, 3
      %p132 = por %p130, %p131
      %p133 = scmp.ne.s32.totalorder %s122, %s123
      %p134 = scmp.eq.s32.totalorder %s24, 0
      %p135 = por %p133, %p134
      %p136 = scmp.ne.s32.totalorder %s122, %s123
      %p137 = scmp.eq.s32.totalorder %s25, 3
      %p138 = por %p136, %p137
      %p140 = scmp.ne.s32.totalorder %s123, %s139
      %p141 = scmp.eq.s32.totalorder %s25, 0
      %p142 = por %p140, %p141
      %s144 = sadd.s32 %s143, 1
      %p147 = scmp.eq.s32.totalorder %s19, 3
      %p148 = scmp.ne.s32.totalorder %s143, %s145
      %p149 = scmp.eq.s32.totalorder %s19, 0
      %p150 = por %p148, %p149
      %p151 = scmp.ne.s32.totalorder %s143, %s145
      %p152 = scmp.eq.s32.totalorder %s24, 3
      %p153 = por %p151, %p152
      %p154 = scmp.ne.s32.totalorder %s145, %s146
      %p155 = scmp.eq.s32.totalorder %s24, 0
      %p156 = por %p154, %p155
      %p157 = scmp.ne.s32.totalorder %s145, %s146
      %p158 = scmp.eq.s32.totalorder %s25, 3
      %p159 = por %p157, %p158
      %p161 = scmp.ne.s32.totalorder %s146, %s160
      %p162 = scmp.eq.s32.totalorder %s25, 0
      %p163 = por %p161, %p162
      %s164 = ssub.s32 %s26, %s38
      %p165 = scmp.eq.s32.totalorder %s164, 0
      %s167 = sadd.s32 %s166, 1
      %s168 = scalar_select %p165, %s166, %s167
      %p171 = pneg %p165
      %p172 = scmp.eq.s32.totalorder %s19, 3
      %p173 = por %p171, %p172
      %p174 = scmp.ne.s32.totalorder %s166, %s169
      %p175 = scmp.eq.s32.totalorder %s19, 0
      %p176 = por %p174, %p175
      %p177 = scmp.ne.s32.totalorder %s166, %s169
      %p178 = scmp.eq.s32.totalorder %s24, 3
      %p179 = por %p177, %p178
      %p180 = scmp.ne.s32.totalorder %s169, %s170
      %p181 = scmp.eq.s32.totalorder %s24, 0
      %p182 = por %p180, %p181
      %p183 = scmp.ne.s32.totalorder %s169, %s170
      %p184 = scmp.eq.s32.totalorder %s25, 3
      %p185 = por %p183, %p184
      %p187 = scmp.ne.s32.totalorder %s170, %s186
      %p188 = scmp.eq.s32.totalorder %s25, 0
      %p189 = por %p187, %p188
      %p190 = scmp.le.s32.totalorder 1, %s19
      %p191 = scmp.lt.s32.totalorder %s19, 5
      %p192 = pnand %p190, %p191
      %p193 = pneg %p192
      // Predicated region
      $region9: #{tpu_custom_call.1} parent=5 // pred_check
        _
      $region10: #{tpu_custom_call.1} parent=5 // pred_check_branch
        %195 = sbr.rel (%p192) target = $region12
      $region11: #{tpu_custom_call.1} parent=5 // pred_region
        %s196 = ssub.s32 %s19, 1
        // Predicated region
        $region13: #{tpu_custom_call.1} parent=11 // pred_check
          %p197 = pneg %p156
        $region14: #{tpu_custom_call.1} parent=11 // pred_check_branch
          %199 = sbr.rel (%p197) target = $region16
        $region15: #{tpu_custom_call.1} parent=11 // pred_region
          _
        $region16: #{tpu_custom_call.1} parent=11 // pred_fallthru
          _
      $region12: #{tpu_custom_call.1} parent=5 // pred_fallthru
        _
      %p200 = scmp.lt.s32.totalorder %s19, 4
      // Predicated region
      $region17: #{tpu_custom_call.1} parent=5 // pred_check
        %p201 = pneg %p200
      $region18: #{tpu_custom_call.1} parent=5 // pred_check_branch
        %203 = sbr.rel (%p201) target = $region20
      $region19: #{tpu_custom_call.1} parent=5 // pred_region
        // Predicated region
        $region21: #{tpu_custom_call.1} parent=19 // pred_check
          %p204 = pneg %p51
        $region22: #{tpu_custom_call.1} parent=19 // pred_check_branch
          %206 = sbr.rel (%p204) target = $region24
        $region23: #{tpu_custom_call.1} parent=19 // pred_region
          %s207 = sand.u32 %s41, 1
          %s208 = scalar_lea.sflag [#allocation5], %s207
          %s209 = sand.u32 %s41, 1
          %s210 = smul.addr %s209, 8
          %s211 = scalar_lea.vmem [#allocation4], %s210
          %s212 = smul.u32 2, %s26
          %s214 = ssub.s32 128, 128
          %215 = vsyncadd %s208, %s214
          %s216 = smul.addr %s212, 64
          %s217 = scalar_lea.hbm %s0, %s216
          %s218 = sshll.u32 %s211, 4
          %s219 = int_to_ptr.vmem [resolvable:$true] %s218
          %224 = dma.hbm_to_vmem [thread:$0]  %s217, 128, %s219, %s208, 64, 64, 4
        $region24: #{tpu_custom_call.1} parent=19 // pred_fallthru
          _
        // Predicated region
        $region25: #{tpu_custom_call.1} parent=19 // pred_check
          %p225 = pneg %p77
        $region26: #{tpu_custom_call.1} parent=19 // pred_check_branch
          %227 = sbr.rel (%p225) target = $region28
        $region27: #{tpu_custom_call.1} parent=19 // pred_region
          %s228 = sand.u32 %s19, 1
          %s229 = scalar_lea.sflag [#allocation8], %s228
          %s230 = sand.u32 %s67, 1
          %s231 = smul.addr %s230, 8
          %s232 = scalar_lea.vmem [#allocation7], %s231
          %s233 = smul.u32 2, %s27
          %s235 = ssub.s32 128, 128
          %236 = vsyncadd %s229, %s235
          %s237 = smul.addr %s233, 64
          %s238 = scalar_lea.hbm %s1, %s237
          %s239 = sshll.u32 %s232, 4
          %s240 = int_to_ptr.vmem [resolvable:$true] %s239
          %245 = dma.hbm_to_vmem [thread:$0]  %s238, 128, %s240, %s229, 64, 64, 4
        $region28: #{tpu_custom_call.1} parent=19 // pred_fallthru
          _
        // Predicated region
        $region29: #{tpu_custom_call.1} parent=19 // pred_check
          %p246 = pneg %p129
        $region30: #{tpu_custom_call.1} parent=19 // pred_check_branch
          %248 = sbr.rel (%p246) target = $region32
        $region31: #{tpu_custom_call.1} parent=19 // pred_region
          %s249 = sand.u32 %s19, 1
          %s250 = scalar_lea.sflag [#allocation8], %s249
          %s251 = sand.u32 %s119, 1
          %s252 = smul.addr %s251, 8
          %s253 = scalar_lea.vmem [#allocation9], %s252
          %s254 = sadd.s32 %s26, 1
          %p255 = scmp.lt.s32.totalorder %s254, 0
          %s256 = ssub.s32 0, %s254
          %s257 = scalar_select %p255, %s256, %s254
          %s258 = sand.u32 %s257, 1
          %s259 = ssub.s32 0, %s258
          %s260 = scalar_select %p255, %s259, %s258
          %p261 = scmp.ne.s32.totalorder %s260, 0
          %p262 = scmp.lt.s32.totalorder %s260, 0
          %p263 = pnand %p262, %p261
          %p264 = pneg %p263
          %s265 = sadd.s32 %s260, 2
          %s266 = scalar_select %p264, %s265, %s260
          %s267 = smul.u32 2, %s266
          %s269 = ssub.s32 128, 128
          %270 = vsyncadd %s250, %s269
          %s271 = smul.addr %s267, 64
          %s272 = scalar_lea.hbm %s2, %s271
          %s273 = sshll.u32 %s253, 4
          %s274 = int_to_ptr.vmem [resolvable:$true] %s273
          %279 = dma.hbm_to_vmem [thread:$0]  %s272, 128, %s274, %s250, 64, 64, 4
        $region32: #{tpu_custom_call.1} parent=19 // pred_fallthru
          _
      $region20: #{tpu_custom_call.1} parent=5 // pred_fallthru
        _
      %p280 = scmp.le.s32.totalorder 1, %s19
      %p281 = scmp.lt.s32.totalorder %s19, 5
      %p282 = pnand %p280, %p281
      %p283 = pneg %p282
      // Predicated region
      $region33: #{tpu_custom_call.1} parent=5 // pred_check
        _
      $region34: #{tpu_custom_call.1} parent=5 // pred_check_branch
        %285 = sbr.rel (%p282) target = $region36
      $region35: #{tpu_custom_call.1} parent=5 // pred_region
        %s286 = ssub.s32 %s19, 1
        %s287 = sand.u32 %s44, 1
        %s288 = scalar_lea.sflag [#allocation5], %s287
        %s289 = sand.u32 %s44, 1
        %s290 = smul.addr %s289, 8
        %s291 = scalar_lea.vmem [#allocation4], %s290
        // Predicated region
        $region37: #{tpu_custom_call.1} parent=35 // pred_check
          %p292 = pneg %p57
        $region38: #{tpu_custom_call.1} parent=35 // pred_check_branch
          %294 = sbr.rel (%p292) target = $region40
        $region39: #{tpu_custom_call.1} parent=35 // pred_region
          %295 = dma.done %s288, 128
        $region40: #{tpu_custom_call.1} parent=35 // pred_fallthru
          _
        %s296 = sand.u32 %s24, 1
        %s297 = scalar_lea.sflag [#allocation8], %s296
        %s298 = sand.u32 %s70, 1
        %s299 = smul.addr %s298, 8
        %s300 = scalar_lea.vmem [#allocation7], %s299
        // Predicated region
        $region41: #{tpu_custom_call.1} parent=35 // pred_check
          %p301 = pneg %p83
        $region42: #{tpu_custom_call.1} parent=35 // pred_check_branch
          %303 = sbr.rel (%p301) target = $region44
        $region43: #{tpu_custom_call.1} parent=35 // pred_region
          %304 = dma.done %s297, 128
        $region44: #{tpu_custom_call.1} parent=35 // pred_fallthru
          _
        %s305 = sand.u32 %s24, 1
        %s306 = scalar_lea.sflag [#allocation8], %s305
        %s307 = sand.u32 %s122, 1
        %s308 = smul.addr %s307, 8
        %s309 = scalar_lea.vmem [#allocation9], %s308
        // Predicated region
        $region45: #{tpu_custom_call.1} parent=35 // pred_check
          %p310 = pneg %p135
        $region46: #{tpu_custom_call.1} parent=35 // pred_check_branch
          %312 = sbr.rel (%p310) target = $region48
        $region47: #{tpu_custom_call.1} parent=35 // pred_region
          %313 = dma.done %s306, 128
        $region48: #{tpu_custom_call.1} parent=35 // pred_fallthru
          _
        %s314 = sand.u32 %s44, 1
        %s315 = scalar_lea.sflag [#allocation5], %s314
        %s316 = sand.u32 %s44, 1
        %s317 = smul.addr %s316, 8
        %s318 = scalar_lea.vmem [#allocation4], %s317
        %p319 = pneg %p57
        %p320 = pneg %p54
        %s321 = sand.u32 %s24, 1
        %s322 = scalar_lea.sflag [#allocation8], %s321
        %s323 = sand.u32 %s70, 1
        %s324 = smul.addr %s323, 8
        %s325 = scalar_lea.vmem [#allocation7], %s324
        %p326 = pneg %p83
        %p327 = pneg %p80
        %s328 = sand.u32 %s24, 1
        %s329 = scalar_lea.sflag [#allocation8], %s328
        %s330 = sand.u32 %s122, 1
        %s331 = smul.addr %s330, 8
        %s332 = scalar_lea.vmem [#allocation9], %s331
        %p333 = pneg %p135
        %p334 = pneg %p132
        %p335 = pneg %p156
        %p336 = pneg %p153
        %p337 = pneg %p182
        %p338 = pneg %p179
        %s339 = sand.u32 %s169, 1
        %s340 = scalar_lea.sflag [#allocation6], %s339
        %s341 = sand.u32 %s169, 1
        %s342 = smul.addr %s341, 16
        %s343 = scalar_lea.vmem [#allocation10], %s342
        %s344 = smul.u32 2, %s28
        %s345 = smul.u32 2, %s29
        %s346 = sadd.s32 %s28, 1
        %p347 = scmp.lt.s32.totalorder %s346, 0
        %s348 = ssub.s32 0, %s346
        %s349 = scalar_select %p347, %s348, %s346
        %s350 = sand.u32 %s349, 1
        %s351 = ssub.s32 0, %s350
        %s352 = scalar_select %p347, %s351, %s350
        %p353 = scmp.ne.s32.totalorder %s352, 0
        %p354 = scmp.lt.s32.totalorder %s352, 0
        %p355 = pnand %p354, %p353
        %p356 = pneg %p355
        %s357 = sadd.s32 %s352, 2
        %s358 = scalar_select %p356, %s357, %s352
        %s359 = smul.u32 2, %s358
        %s360 = smul.u32 2, %s28
        %p362 = scmp.eq.s32.totalorder %s29, 0
        // Predicated region
        $region49: #{tpu_custom_call.1} parent=35 // pred_check
          %p363 = pneg %p362
        $region50: #{tpu_custom_call.1} parent=35 // pred_check_branch
          %365 = sbr.rel (%p363) target = $region52
        $region51: #{tpu_custom_call.1} parent=35 // pred_region
          %v366 = vld [vmem:[%s291] sm:$0xf]
          %v367 = vld [vmem:[%s291 + $0x4] sm:$0xf]
          %v368 = vunpack.c.l.bf16 %v366
          %v369 = vunpack.c.l.bf16 %v367
          %v370 = vld [vmem:[%s3] sm:$0xf]
          %v371 = vld [vmem:[%s3 + $0x4] sm:$0xf]
          %v372 = vunpack.c.l.bf16 %v370
          %v373 = vunpack.c.l.bf16 %v371
          %v374 = vmul.f32 %v368, %v372
          %v375 = vmul.f32 %v369, %v373
          %376 = vadd.xlane.f32.xlu0 %v374
          %v377 = vpop.xlane.xlu0 %376
          %378 = vadd.xlane.f32.xlu0 %v375
          %v379 = vpop.xlane.xlu0 %378
          %v380 = vmul.f32 %v377, 2.0
          %v381 = vmul.f32 %v379, 2.0
          %vm382 = vcmask 7168
          %383 = vst.msk [vmem:[#allocation2] sm:$0xff] %vm382, %v380
          %384 = vst.msk [vmem:[#allocation2 + $0x8] sm:$0xff] %vm382, %v381
          %385 = vst.msk [vmem:[#allocation3] sm:$0xff] %vm382, 1.0
          %386 = vst.msk [vmem:[#allocation3 + $0x8] sm:$0xff] %vm382, 1.0
        $region52: #{tpu_custom_call.1} parent=35 // pred_fallthru
          _
        %v387 = vld [vmem:[%s291] sm:$0xf]
        %v388 = vld [vmem:[%s291 + $0x4] sm:$0xf]
        %v389 = vld [vmem:[%s300] sm:$0xf]
        %v390 = vld [vmem:[%s300 + $0x4] sm:$0xf]
        %v393 = vunpack.c.l.b16 %v387
        %v394 = vunpack.c.l.b16 %v388
        %v395 = vpack.c.b16 %v394, %v393
        %v399 = vunpack.c.l.b16 %v389
        %v400 = vunpack.c.l.b16 %v390
        %v401 = vpack.c.b16 %v400, %v399
        %403 = vmatprep.subr.bf16.mxu0 0
        %404 = vmatpush1.bf16.xpose.msra.mxu0 %v401
        %405 = vmatprep.subr.bf16.mxu0 0
        %406 = vmatpush1.bf16.xpose.msra.mxu0 0
        %407 = vmatprep.subr.bf16.mxu0 0
        %408 = vmatpush1.bf16.xpose.msra.mxu0 0
        %409 = vmatprep.subr.bf16.mxu0 0
        %410 = vmatpush1.bf16.xpose.msra.mxu0 0
        %411 = vmatprep.subr.bf16.mxu0 0
        %412 = vmatpush1.bf16.xpose.msra.mxu0 0
        %413 = vmatprep.subr.bf16.mxu0 0
        %414 = vmatpush1.bf16.xpose.msra.mxu0 0
        %415 = vmatprep.subr.bf16.mxu0 0
        %416 = vmatpush1.bf16.xpose.msra.mxu0 0
        %417 = vmatprep.subr.bf16.mxu0 0
        %418 = vmatpush1.bf16.xpose.msra.mxu0 0
        %419 = vmatprep.subr.bf16.mxu0 0
        %420 = vmatpush1.bf16.xpose.msra.mxu0 0
        %421 = vmatprep.subr.bf16.mxu0 0
        %422 = vmatpush1.bf16.xpose.msra.mxu0 0
        %423 = vmatprep.subr.bf16.mxu0 0
        %424 = vmatpush1.bf16.xpose.msra.mxu0 0
        %425 = vmatprep.subr.bf16.mxu0 0
        %426 = vmatpush1.bf16.xpose.msra.mxu0 0
        %427 = vmatprep.subr.bf16.mxu0 0
        %428 = vmatpush1.bf16.xpose.msra.mxu0 0
        %429 = vmatprep.subr.bf16.mxu0 0
        %430 = vmatpush1.bf16.xpose.msra.mxu0 0
        %431 = vmatprep.subr.bf16.mxu0 0
        %432 = vmatpush1.bf16.xpose.msra.mxu0 0
        %433 = vmatprep.subr.bf16.mxu0 0
        %434 = vmatpush1.bf16.xpose.msra.mxu0 0
        %435 = vmatprep.mubr.bf16.mxu0 0
        %436 = vmatmul.mubr.bf16.gmra.mrb[0].mxu0 %v395
        %v437 = vpop.f32.mrb[0].mxu0
        %v438 = vadd.f32 0.0, %v437
        %v439 = vpop.f32.mrb[0].mxu0
        %v440 = vpop.f32.mrb[0].mxu0
        %v441 = vadd.f32 0.0, %v440
        %v442 = vpop.f32.mrb[0].mxu0
        %443 = vdwg.mxu0
        %v444 = vmul.f32 %v438, 2.0
        %v445 = vmul.f32 %v441, 2.0
        %s446 = smul.u32 %s29, 16
        %v447 = vlaneseq
        %v448 = vand.u32 %v447, 127
        %v449 = vstv %s446
        %v450 = vadd.s32 %v449, %v448
        %vm451 = vcmp.lt.s32.totalorder %v450, 4
        %vm452 = vcmp.ge.s32.totalorder %v450, 16
        %vm453 = vcmp.lt.s32.totalorder %v450, 20
        %vm454 = vmand %vm452, %vm453
        %vm455 = vmor %vm451, %vm454
        %v456 = vsel %vm455, %v444, -3e+38
        %v457 = vsel %vm455, %v445, -3e+38
        %p458 = scmp.eq.s32.totalorder %s28, %s29
        // Predicated region
        $region53: #{tpu_custom_call.1} parent=35 // pred_check
          %p459 = pneg %p458
        $region54: #{tpu_custom_call.1} parent=35 // pred_check_branch
          %461 = sbr.rel (%p459) target = $region56
        $region55: #{tpu_custom_call.1} parent=35 // pred_region
          %v462 = vlaneseq
          %v463 = vshrl.u32 %v462, 7
          %v464 = vadd.s32 %v463, 8
          %vm465 = vcmp.eq.s32.totalorder %v463, %v448
          %vm466 = vcmp.eq.s32.totalorder %v464, %v448
          %v467 = vsel %vm465, -3e+38, %v456
          %v468 = vsel %vm466, -3e+38, %v457
          %v469 = vld [vmem:[#allocation2] sm:$0xff]
          %v470 = vld [vmem:[#allocation2 + $0x8] sm:$0xff]
          %vm471 = vcmask 130048
          %v472 = vsel %vm471, %v467, -inf
          %473 = vmax.xlane.f32.xlu0 %v472
          %v474 = vpop.xlane.xlu0 %473
          %v475 = vsel %vm471, %v468, -inf
          %476 = vmax.xlane.f32.xlu0 %v475
          %v477 = vpop.xlane.xlu0 %476
          %v478 = vmax.f32 %v469, %v474
          %v479 = vmax.f32 %v470, %v477
          %481 = vset.pattern.permute.xlu0 0
          %482 = vperm.xlu0 %481, %v478
          %v483 = vpop.permute.xlu0 %482
          %486 = vset.pattern.permute.xlu0 0
          %487 = vperm.xlu0 %486, %v479
          %v488 = vpop.permute.xlu0 %487
          %v490 = vsub.f32 %v467, %v483
          %v491 = vsub.f32 %v468, %v488
          %v492 = vmul.f32 %v490, 1.442695
          %v493 = vpow.pop %v492
          %v494 = vmul.f32 %v491, 1.442695
          %v495 = vpow.pop %v494
          %v496 = vsel %vm471, %v493, 0.0
          %497 = vadd.xlane.f32.xlu0 %v496
          %v498 = vpop.xlane.xlu0 %497
          %v499 = vsel %vm471, %v495, 0.0
          %500 = vadd.xlane.f32.xlu0 %v499
          %v501 = vpop.xlane.xlu0 %500
          %v502 = vsub.f32 %v469, %v478
          %v503 = vsub.f32 %v470, %v479
          %v504 = vmul.f32 %v502, 1.442695
          %v505 = vpow.pop %v504
          %v506 = vmul.f32 %v503, 1.442695
          %v507 = vpow.pop %v506
          %v508 = vld [vmem:[#allocation3] sm:$0xff]
          %v509 = vld [vmem:[#allocation3 + $0x8] sm:$0xff]
          %v510 = vmul.f32 %v505, %v508
          %v511 = vmul.f32 %v507, %v509
          %v512 = vadd.f32 %v510, %v498
          %v513 = vadd.f32 %v511, %v501
          %vm514 = vcmask 7168
          %515 = vst.msk [vmem:[#allocation3] sm:$0xff] %vm514, %v512
          %516 = vst.msk [vmem:[#allocation3 + $0x8] sm:$0xff] %vm514, %v513
          %517 = vst.msk [vmem:[#allocation2] sm:$0xff] %vm514, %v478
          %518 = vst.msk [vmem:[#allocation2 + $0x8] sm:$0xff] %vm514, %v479
        $region56: #{tpu_custom_call.1} parent=35 // pred_fallthru
          _
        %p519 = scmp.ne.s32.totalorder %s28, %s29
        // Predicated region
        $region57: #{tpu_custom_call.1} parent=35 // pred_check
          %p520 = pneg %p519
        $region58: #{tpu_custom_call.1} parent=35 // pred_check_branch
          %522 = sbr.rel (%p520) target = $region60
        $region59: #{tpu_custom_call.1} parent=35 // pred_region
          %v523 = vld [vmem:[#allocation2] sm:$0xff]
          %v524 = vld [vmem:[#allocation2 + $0x8] sm:$0xff]
          %vm525 = vcmask 130048
          %v526 = vsel %vm525, %v456, -inf
          %527 = vmax.xlane.f32.xlu0 %v526
          %v528 = vpop.xlane.xlu0 %527
          %v529 = vsel %vm525, %v457, -inf
          %530 = vmax.xlane.f32.xlu0 %v529
          %v531 = vpop.xlane.xlu0 %530
          %v532 = vmax.f32 %v523, %v528
          %v533 = vmax.f32 %v524, %v531
          %535 = vset.pattern.permute.xlu0 0
          %536 = vperm.xlu0 %535, %v532
          %v537 = vpop.permute.xlu0 %536
          %540 = vset.pattern.permute.xlu0 0
          %541 = vperm.xlu0 %540, %v533
          %v542 = vpop.permute.xlu0 %541
          %v544 = vsub.f32 %v456, %v537
          %v545 = vsub.f32 %v457, %v542
          %v546 = vmul.f32 %v544, 1.442695
          %v547 = vpow.pop %v546
          %v548 = vmul.f32 %v545, 1.442695
          %v549 = vpow.pop %v548
          %v550 = vsel %vm525, %v547, 0.0
          %551 = vadd.xlane.f32.xlu0 %v550
          %v552 = vpop.xlane.xlu0 %551
          %v553 = vsel %vm525, %v549, 0.0
          %554 = vadd.xlane.f32.xlu0 %v553
          %v555 = vpop.xlane.xlu0 %554
          %v556 = vsub.f32 %v523, %v532
          %v557 = vsub.f32 %v524, %v533
          %v558 = vmul.f32 %v556, 1.442695
          %v559 = vpow.pop %v558
          %v560 = vmul.f32 %v557, 1.442695
          %v561 = vpow.pop %v560
          %v562 = vld [vmem:[#allocation3] sm:$0xff]
          %v563 = vld [vmem:[#allocation3 + $0x8] sm:$0xff]
          %v564 = vmul.f32 %v559, %v562
          %v565 = vmul.f32 %v561, %v563
          %v566 = vadd.f32 %v564, %v552
          %v567 = vadd.f32 %v565, %v555
          %vm568 = vcmask 7168
          %569 = vst.msk [vmem:[#allocation3] sm:$0xff] %vm568, %v566
          %570 = vst.msk [vmem:[#allocation3 + $0x8] sm:$0xff] %vm568, %v567
          %571 = vst.msk [vmem:[#allocation2] sm:$0xff] %vm568, %v532
          %572 = vst.msk [vmem:[#allocation2 + $0x8] sm:$0xff] %vm568, %v533
        $region60: #{tpu_custom_call.1} parent=35 // pred_fallthru
          _
        %p573 = scmp.eq.s32.totalorder %s29, 1
        // Predicated region
        $region61: #{tpu_custom_call.1} parent=35 // pred_check
          %p574 = pneg %p573
        $region62: #{tpu_custom_call.1} parent=35 // pred_check_branch
          %576 = sbr.rel (%p574) target = $region64
        $region63: #{tpu_custom_call.1} parent=35 // pred_region
          %v577 = vld [vmem:[%s291] sm:$0xf]
          %v578 = vld [vmem:[%s291 + $0x4] sm:$0xf]
          %v579 = vunpack.c.l.bf16 %v577
          %v580 = vunpack.c.l.bf16 %v578
          %v581 = vld [vmem:[%s309] sm:$0xf]
          %v582 = vld [vmem:[%s309 + $0x4] sm:$0xf]
          %v583 = vunpack.c.l.bf16 %v581
          %v584 = vunpack.c.l.bf16 %v582
          %v585 = vmul.f32 %v579, %v583
          %v586 = vmul.f32 %v580, %v584
          %587 = vadd.xlane.f32.xlu0 %v585
          %v588 = vpop.xlane.xlu0 %587
          %589 = vadd.xlane.f32.xlu0 %v586
          %v590 = vpop.xlane.xlu0 %589
          %v591 = vmul.f32 %v588, 2.0
          %v592 = vmul.f32 %v590, 2.0
          %v593 = vld [vmem:[#allocation2] sm:$0xff]
          %v594 = vld [vmem:[#allocation2 + $0x8] sm:$0xff]
          %v595 = vld [vmem:[#allocation3] sm:$0xff]
          %v596 = vld [vmem:[#allocation3 + $0x8] sm:$0xff]
          %v597 = vlog2.pop %v595
          %v598 = vmul.f32 %v597, 0.6931472
          %v599 = vlog2.pop %v596
          %v600 = vmul.f32 %v599, 0.6931472
          %v601 = vadd.f32 %v593, %v598
          %v602 = vadd.f32 %v594, %v600
          %v603 = vsub.f32 %v601, %v591
          %v604 = vsub.f32 %v602, %v592
          %606 = vset.pattern.permute.xlu0 0
          %607 = vperm.xlu0 %606, %v603
          %v608 = vpop.permute.xlu0 %607
          %611 = vset.pattern.permute.xlu0 0
          %612 = vperm.xlu0 %611, %v604
          %v613 = vpop.permute.xlu0 %612
          %s615 = smul.u32 %s28, 16
          %v616 = vlaneseq
          %v617 = vshrl.u32 %v616, 7
          %v618 = vadd.s32 %v617, 8
          %v619 = vstv %s615
          %v620 = vadd.s32 %v619, %v617
          %v621 = vadd.s32 %v619, %v618
          %vm622 = vcmp.lt.s32.totalorder %v620, 4
          %vm623 = vcmp.lt.s32.totalorder %v621, 4
          %vm624 = vcmp.ge.s32.totalorder %v620, 16
          %vm625 = vcmp.ge.s32.totalorder %v621, 16
          %vm626 = vcmp.lt.s32.totalorder %v620, 20
          %vm627 = vcmp.lt.s32.totalorder %v621, 20
          %vm628 = vmand %vm624, %vm626
          %vm629 = vmand %vm625, %vm627
          %vm630 = vmor %vm622, %vm628
          %vm631 = vmor %vm623, %vm629
          %v632 = vsel %vm630, %v608, 0.0
          %v633 = vsel %vm631, %v613, 0.0
          %634 = vst [vmem:[%s343] sm:$0xff] %v632
          %635 = vst [vmem:[%s343 + $0x8] sm:$0xff] %v633
        $region64: #{tpu_custom_call.1} parent=35 // pred_fallthru
          _
        %s636 = sand.u32 %s169, 1
        %s637 = scalar_lea.sflag [#allocation6], %s636
        %s638 = sand.u32 %s169, 1
        %s639 = smul.addr %s638, 16
        %s640 = scalar_lea.vmem [#allocation10], %s639
        // Predicated region
        $region65: #{tpu_custom_call.1} parent=35 // pred_check
          %p641 = pneg %p179
        $region66: #{tpu_custom_call.1} parent=35 // pred_check_branch
          %643 = sbr.rel (%p641) target = $region68
        $region67: #{tpu_custom_call.1} parent=35 // pred_region
          %s644 = smul.u32 2, %s28
          %s646 = ssub.s32 256, 256
          %647 = vsyncadd %s637, %s646
          %s648 = smul.addr %s644, 128
          %s649 = scalar_lea.hbm %s4, %s648
          %s650 = sshll.u32 %s640, 4
          %s651 = int_to_ptr.vmem [resolvable:$true] %s650
          %656 = dma.vmem_to_hbm [thread:$0]  %s651, 256, %s649, %s637, 128, 128, 8
        $region68: #{tpu_custom_call.1} parent=35 // pred_fallthru
          _
      $region36: #{tpu_custom_call.1} parent=5 // pred_fallthru
        _
      %p657 = scmp.le.s32.totalorder 2, %s19
      // Predicated region
      $region69: #{tpu_custom_call.1} parent=5 // pred_check
        %p658 = pneg %p657
      $region70: #{tpu_custom_call.1} parent=5 // pred_check_branch
        %660 = sbr.rel (%p658) target = $region72
      $region71: #{tpu_custom_call.1} parent=5 // pred_region
        %s661 = ssub.s32 %s19, 2
        // Predicated region
        $region73: #{tpu_custom_call.1} parent=71 // pred_check
          %p662 = pneg %p185
        $region74: #{tpu_custom_call.1} parent=71 // pred_check_branch
          %664 = sbr.rel (%p662) target = $region76
        $region75: #{tpu_custom_call.1} parent=71 // pred_region
          %s665 = sand.u32 %s170, 1
          %s666 = scalar_lea.sflag [#allocation6], %s665
          %s667 = sand.u32 %s170, 1
          %s668 = smul.addr %s667, 16
          %s669 = scalar_lea.vmem [#allocation10], %s668
          %670 = dma.done %s666, 256
        $region76: #{tpu_custom_call.1} parent=71 // pred_fallthru
          _
      $region72: #{tpu_custom_call.1} parent=5 // pred_fallthru
        _
    $region6: #{tpu_custom_call.1} parent=1 // loop_footer
      %s23 = sadd.s32 1, %s19
    $region7: #{tpu_custom_call.1} parent=1 // loop_footer_branch
      %18 = sbr.rel target = $region3
    $region8: #{tpu_custom_call.1} parent=1 // loop_exit
      _
    %671 = vsyncpa [#allocation5], 1
    %s672 = scalar_lea.sflag [#allocation5], 1
    %673 = vsyncpa %s672, 1
    %674 = vsyncpa [#allocation8], 1
    %s675 = scalar_lea.sflag [#allocation8], 1
    %676 = vsyncpa %s675, 1
    %677 = vsyncpa [#allocation6], 1
    %s678 = scalar_lea.sflag [#allocation6], 1
    %679 = vsyncpa %s678, 1

</llo_original>
